<compile_context>
chip_gen: v7x
topology: tpu7x:2x2x1
jax: 0.10.0
libtpu: 0.0.40
codegen_flags: <defaults>
</compile_context>

<pallas_src>
from functools import partial

import jax
import jax.numpy as jnp
from jax.experimental import pallas as pl
from jax.experimental.pallas import tpu as pltpu

LN_EPS = 1e-5          # nn.LayerNorm default eps (self.layer_norm = nn.LayerNorm(pct_dim))
LEAKY_SLOPE = 0.02     # nn.LeakyReLU(negative_slope=0.02)


def _round_up(x, m):
    return ((x + m - 1) // m) * m


def _pick_tile_nt(g, batch, channels, itemsize, tail_len,
                  max_block_bytes=4 << 20, cap=2048):
    """Largest multiple of 8 that divides 64*g (so the 64*g token offset is an
    integral number of blocks), bounded by a per-block VMEM byte budget and the
    tail length. 64*g is always a multiple of 64, so 8 is always valid."""
    base = 64 * g
    row_bytes = batch * channels * itemsize
    limit = min(cap,
                max(8, max_block_bytes // max(row_bytes, 1)),
                _round_up(tail_len, 8))
    best = 8
    t = 8
    while t <= limit:
        if base % t == 0:
            best = t
        t += 8
    return best


def _prompt_kernel(spm_ref, pos_ref, w_t_ref, b_ref, ln_w_ref, ln_b_ref,
                   out_ref, acc_ref, *, g, n_tokens, tok_offset, batch):
    """Streaming running-max over the SPM tail + fused prompt update.

    spm_ref : (B, tile_nt, C)  current token tile of the full spm_feature
    pos_ref : (3, C)           prompt_pos with the size-1 axis squeezed
    w_t_ref : (C, C)           Conv1d weight[:, :, 0] transposed (y = x @ w_t + b)
    b_ref   : (1, C)           Conv1d bias
    ln_w_ref, ln_b_ref : (1, C) LayerNorm affine params
    out_ref : (3*B, C)         level-major prompt rows (row = lvl*B + b)
    acc_ref : (3*B, C) f32     running max per (level, batch)
    """
    pid = pl.program_id(0)
    B = batch
    tile_nt = spm_ref.shape[1]

    @pl.when(pid == 0)
    def _init():
        acc_ref[...] = jnp.full_like(acc_ref, -jnp.inf)

    # Global token index of each row in this tile.
    tok = (tok_offset + pid * tile_nt
           + jax.lax.broadcasted_iota(jnp.int32, (tile_nt, 1), 0))
    x = spm_ref[...].astype(jnp.float32)                       # (B, tile_nt, C)

    # Level boundaries in GLOBAL token indices; level 2 runs to the end of the
    # sequence (matches spm_feature[:, 84*g:]) and also masks any ragged /
    # out-of-bounds rows of the last block with -inf.
    bounds = ((tok_offset, tok_offset + 16 * g),
              (tok_offset + 16 * g, tok_offset + 20 * g),
              (tok_offset + 20 * g, n_tokens))
    for lvl, (lo, hi) in enumerate(bounds):
        mask = (tok >= lo) & (tok < hi)                        # (tile_nt, 1)
        lvl_max = jnp.max(jnp.where(mask[None, :, :], x, -jnp.inf), axis=1)  # (B, C)
        rows = slice(lvl * B, (lvl + 1) * B)
        acc_ref[rows, :] = jnp.maximum(acc_ref[rows, :], lvl_max)

    @pl.when(pid == pl.num_programs(0) - 1)
    def _finalize():
        # Fused: one (3B, C) x (C, C) matmul for all three levels, then
        # LeakyReLU + LayerNorm, and a single store.
        x2 = jnp.concatenate(
            [acc_ref[l * B:(l + 1) * B, :] + pos_ref[l:l + 1, :] for l in range(3)],
            axis=0)                                            # (3B, C)
        y = jnp.dot(x2, w_t_ref[...], preferred_element_type=jnp.float32) + b_ref[...]
        y = jnp.where(y >= 0, y, LEAKY_SLOPE * y)              # LeakyReLU(0.02)
        mean = jnp.mean(y, axis=-1, keepdims=True)
        var = jnp.mean(jnp.square(y - mean), axis=-1, keepdims=True)
        y = (y - mean) * jax.lax.rsqrt(var + LN_EPS)
        y = y * ln_w_ref[...] + ln_b_ref[...]
        out_ref[...] = y.astype(out_ref.dtype)


def compute_prompts(spm_feature, params):
    """Pallas kernel wrapper: returns (B, 3, C) dynamic prompts."""
    B, N, C = spm_feature.shape
    g = N // 85
    if g < 1:
        raise ValueError("split_spm assumes at least 85 tokens (N // 85 >= 1)")
    off = 64 * g                    # start of the pooled tail
    nt = N - off                    # tail length (>= 21*g; includes remainder)
    itemsize = jnp.dtype(spm_feature.dtype).itemsize
    tile_nt = _pick_tile_nt(g, B, C, itemsize, nt)
    off_blocks = off // tile_nt     # integral by construction of tile_nt
    num_tiles = pl.cdiv(nt, tile_nt)

    out2d = pl.pallas_call(
        partial(_prompt_kernel, g=g, n_tokens=N, tok_offset=off, batch=B),
        out_shape=jax.ShapeDtypeStruct((3 * B, C), jnp.float32),
        grid=(num_tiles,),
        in_specs=[
            # Full spm_feature; the 64*g offset is folded into the index_map so
            # no HBM copy of the tail is made in the wrapper.
            pl.BlockSpec((B, tile_nt, C), lambda i: (0, off_blocks + i, 0)),
            pl.BlockSpec((3, C), lambda i: (0, 0)),
            pl.BlockSpec((C, C), lambda i: (0, 0)),
            pl.BlockSpec((1, C), lambda i: (0, 0)),
            pl.BlockSpec((1, C), lambda i: (0, 0)),
            pl.BlockSpec((1, C), lambda i: (0, 0)),
        ],
        out_specs=pl.BlockSpec((3 * B, C), lambda i: (0, 0)),
        scratch_shapes=[pltpu.VMEM((3 * B, C), jnp.float32)],
        compiler_params=pltpu.CompilerParams(
            dimension_semantics=("arbitrary",)),   # reduction axis
    )(spm_feature, params["prompt_pos"], params["conv_w_t"], params["conv_b"],
      params["ln_w"], params["ln_b"])

    # (3*B, C) level-major -> (B, 3, C); tiny XLA glue on 3*B*C elements.
    return jnp.transpose(out2d.reshape(3, B, C), (1, 0, 2))


def interaction_block_forward(spm_feature, pct_feature, params,
                              blocks=(), feature_list=None, idx_start=0):
    """Mirrors InteractionBlock.forward."""
    if feature_list is None:
        feature_list = []
    prompts = compute_prompts(spm_feature, params)                    # (B, 3, C)
    pct = jnp.concatenate([prompts, pct_feature], axis=1)             # (B, 3+M, C)

    fetch_idx = (2, 5, 8, 11)
    # TODO(synk): `blocks` are external transformer modules passed in at call
    # time (not part of this module); any JAX callables supplied here are applied.
    for idx, blk in enumerate(blocks):
        pct = blk(pct)
        if idx_start + idx in fetch_idx:
            feature_list.append(jnp.transpose(pct[:, 3:], (0, 2, 1)))

    # TODO(synk): the `extractor` cross-attention class is not defined in the
    # provided source, so spm_feature is returned unchanged here.
    spm_out = spm_feature
    pct_out = pct[:, 3:]
    return pct_out, spm_out, feature_list


def init_params(key, pct_dim):
    """Deterministic synthetic parameters matching the PyTorch module shapes."""
    k1, k2, k3 = jax.random.split(key, 3)
    # nn.Parameter(torch.randn(3, 1, pct_dim)) -> stored squeezed as (3, C)
    prompt_pos = jax.random.normal(k1, (3, pct_dim), jnp.float32)
    # nn.Conv1d(pct_dim, pct_dim, 1): weight (C, C, 1), bias (C,)
    bound = 1.0 / float(pct_dim) ** 0.5
    conv_w = jax.random.uniform(k2, (pct_dim, pct_dim), jnp.float32, -bound, bound)
    conv_b = jax.random.uniform(k3, (1, pct_dim), jnp.float32, -bound, bound)
    # nn.LayerNorm(pct_dim)
    ln_w = jnp.ones((1, pct_dim), jnp.float32)
    ln_b = jnp.zeros((1, pct_dim), jnp.float32)
    return dict(prompt_pos=prompt_pos, conv_w_t=conv_w.T, conv_b=conv_b,
                ln_w=ln_w, ln_b=ln_b)


def _reference_prompts(spm_feature, params):
    """Pure-JAX reference for the in-kernel compute (for validation)."""
    B, N, C = spm_feature.shape
    g = N // 85
    slices = [spm_feature[:, 64 * g:80 * g], spm_feature[:, 80 * g:84 * g],
              spm_feature[:, 84 * g:]]
    outs = []
    for i, item in enumerate(slices):
        pooled = jnp.max(item, axis=1) + params["prompt_pos"][i:i + 1]
        y = pooled @ params["conv_w_t"] + params["conv_b"]
        y = jnp.where(y >= 0, y, LEAKY_SLOPE * y)
        mean = y.mean(-1, keepdims=True)
        var = ((y - mean) ** 2).mean(-1, keepdims=True)
        y = (y - mean) / jnp.sqrt(var + LN_EPS)
        outs.append(y * params["ln_w"] + params["ln_b"])
    return jnp.stack(outs, axis=1)


if __name__ == "__main__":
    B, G, C, M = 2, 2, 128, 8          # batch, SPM group factor, pct_dim, #pct tokens
    N = 85 * G                         # spm sequence length (split_spm assumes N = 85*G)

    key = jax.random.PRNGKey(0)
    kspm, kpct, kparam, kextra = jax.random.split(key, 4)
    spm_feature = jax.random.normal(kspm, (B, N, C), jnp.float32)
    pct_feature = jax.random.normal(kpct, (B, M, C), jnp.float32)
    params = init_params(kparam, C)

    pct_out, spm_out, feats = interaction_block_forward(
        spm_feature, pct_feature, params, blocks=(), feature_list=[], idx_start=0)
    jax.block_until_ready((pct_out, spm_out))

    # validate the Pallas kernel against the pure-JAX reference
    got = jax.block_until_ready(compute_prompts(spm_feature, params))
    ref = _reference_prompts(spm_feature, params)
    assert got.shape == (B, 3, C)
    assert pct_out.shape == (B, M, C)
    assert spm_out.shape == (B, N, C)
    assert jnp.allclose(got, ref, atol=1e-5, rtol=1e-5)

    # sequence length not a multiple of 85: the third SPM level must run to the
    # end of the sequence (multi-tile grid + ragged last block masking path)
    N2 = 85 * G + 12
    spm2 = jax.random.normal(kextra, (B, N2, C), jnp.float32)
    got2 = jax.block_until_ready(compute_prompts(spm2, params))
    ref2 = _reference_prompts(spm2, params)
    assert jnp.allclose(got2, ref2, atol=1e-5, rtol=1e-5)

    print("KERNEL_OK")
</pallas_src>

<mosaic_0001>
module attributes {stable_mosaic.version = 11 : i64} {
  func.func @_prompt_kernel(%arg0: i32, %arg1: memref<2x32x128xf32, #tpu.memory_space<vmem>>, %arg2: memref<3x128xf32, #tpu.memory_space<vmem>>, %arg3: memref<128x128xf32, #tpu.memory_space<vmem>>, %arg4: memref<1x128xf32, #tpu.memory_space<vmem>>, %arg5: memref<1x128xf32, #tpu.memory_space<vmem>>, %arg6: memref<1x128xf32, #tpu.memory_space<vmem>>, %arg7: memref<6x128xf32, #tpu.memory_space<vmem>>, %arg8: memref<6x128xf32, #tpu.memory_space<vmem>>) attributes {dimension_semantics = [#tpu.dimension_semantics<arbitrary>], iteration_bounds = array<i64: 2>, scalar_prefetch = 0 : i64, scratch_operands = 1 : i64, tpu.core_type = #tpu.core_type<tc>, window_params = [{transform_indices = @transform_0, window_bounds = array<i64: 2, 32, 128>}, {pipeline_mode = #tpu.pipeline_mode<synchronous>, transform_indices = @transform_1, window_bounds = array<i64: 3, 128>}, {pipeline_mode = #tpu.pipeline_mode<synchronous>, transform_indices = @transform_2, window_bounds = array<i64: 128, 128>}, {pipeline_mode = #tpu.pipeline_mode<synchronous>, transform_indices = @transform_3, window_bounds = array<i64: 1, 128>}, {pipeline_mode = #tpu.pipeline_mode<synchronous>, transform_indices = @transform_4, window_bounds = array<i64: 1, 128>}, {pipeline_mode = #tpu.pipeline_mode<synchronous>, transform_indices = @transform_5, window_bounds = array<i64: 1, 128>}, {pipeline_mode = #tpu.pipeline_mode<synchronous>, transform_indices = @transform_6, window_bounds = array<i64: 6, 128>}]} {
    %c0_i32 = arith.constant 0 : i32
    %0 = arith.cmpi eq, %arg0, %c0_i32 : i32
    %1 = arith.extui %0 : i1 to i32
    %c0_i32_0 = arith.constant 0 : i32
    %2 = arith.cmpi ne, %1, %c0_i32_0 : i32
    scf.if %2 {
      %cst_22 = arith.constant 0xFF800000 : f32
      %54 = vector.broadcast %cst_22 : f32 to vector<6x128xf32>
      %c0_23 = arith.constant 0 : index
      %c0_24 = arith.constant 0 : index
      %55 = vector.load %arg8[%c0_23, %c0_24] : memref<6x128xf32, #tpu.memory_space<vmem>>, vector<6x128xf32>
      tpu.vector_store %arg8[%c0_23, %c0_24], %54 {strides = array<i32>} : memref<6x128xf32, #tpu.memory_space<vmem>>, vector<6x128xf32>,
    } else {
    }
    %c32_i32 = arith.constant 32 : i32
    %3 = arith.muli %arg0, %c32_i32 : i32
    %c128_i32 = arith.constant 128 : i32
    %4 = arith.addi %c128_i32, %3 : i32
    %5 = tpu.iota {dimensions = array<i32: 0>} : vector<32x1xi32>
    %6 = vector.broadcast %4 : i32 to vector<32x1xi32>
    %7 = arith.addi %6, %5 : vector<32x1xi32>
    %c0 = arith.constant 0 : index
    %c0_1 = arith.constant 0 : index
    %c0_2 = arith.constant 0 : index
    %8 = vector.load %arg1[%c0, %c0_1, %c0_2] : memref<2x32x128xf32, #tpu.memory_space<vmem>>, vector<2x32x128xf32>
    %c128_i32_3 = arith.constant 128 : i32
    %9 = vector.broadcast %c128_i32_3 : i32 to vector<32x1xi32>
    %10 = arith.cmpi sge, %7, %9 : vector<32x1xi32>
    %c160_i32 = arith.constant 160 : i32
    %11 = vector.broadcast %c160_i32 : i32 to vector<32x1xi32>
    %12 = arith.cmpi slt, %7, %11 : vector<32x1xi32>
    %13 = arith.andi %10, %12 : vector<32x1xi1>
    %14 = vector.shape_cast %13 : vector<32x1xi1> to vector<1x32x1xi1>
    %cst = arith.constant 0xFF800000 : f32
    %15 = vector.shape_cast %14 : vector<1x32x1xi1> to vector<1x32x1xi1>
    %16 = vector.broadcast %15 : vector<1x32x1xi1> to vector<2x32x128xi1>
    %17 = vector.broadcast %cst : f32 to vector<2x32x128xf32>
    %18 = arith.select %16, %8, %17 : vector<2x32x128xi1>, vector<2x32x128xf32>
    %cst_4 = arith.constant dense<0xFF800000> : vector<2x128xf32>
    %19 = vector.multi_reduction <maximumf>, %18, %cst_4 [1] : vector<2x32x128xf32> to vector<2x128xf32>
    %c0_5 = arith.constant 0 : index
    %c0_6 = arith.constant 0 : index
    %20 = vector.load %arg8[%c0_5, %c0_6] : memref<6x128xf32, #tpu.memory_space<vmem>>, vector<2x128xf32>
    %21 = arith.maximumf %20, %19 : vector<2x128xf32>
    %c0_7 = arith.constant 0 : index
    %c0_8 = arith.constant 0 : index
    %22 = vector.load %arg8[%c0_7, %c0_8] : memref<6x128xf32, #tpu.memory_space<vmem>>, vector<2x128xf32>
    tpu.vector_store %arg8[%c0_7, %c0_8], %21 {strides = array<i32>} : memref<6x128xf32, #tpu.memory_space<vmem>>, vector<2x128xf32>,
    %c160_i32_9 = arith.constant 160 : i32
    %23 = vector.broadcast %c160_i32_9 : i32 to vector<32x1xi32>
    %24 = arith.cmpi sge, %7, %23 : vector<32x1xi32>
    %c168_i32 = arith.constant 168 : i32
    %25 = vector.broadcast %c168_i32 : i32 to vector<32x1xi32>
    %26 = arith.cmpi slt, %7, %25 : vector<32x1xi32>
    %27 = arith.andi %24, %26 : vector<32x1xi1>
    %28 = vector.shape_cast %27 : vector<32x1xi1> to vector<1x32x1xi1>
    %cst_10 = arith.constant 0xFF800000 : f32
    %29 = vector.shape_cast %28 : vector<1x32x1xi1> to vector<1x32x1xi1>
    %30 = vector.broadcast %29 : vector<1x32x1xi1> to vector<2x32x128xi1>
    %31 = vector.broadcast %cst_10 : f32 to vector<2x32x128xf32>
    %32 = arith.select %30, %8, %31 : vector<2x32x128xi1>, vector<2x32x128xf32>
    %cst_11 = arith.constant dense<0xFF800000> : vector<2x128xf32>
    %33 = vector.multi_reduction <maximumf>, %32, %cst_11 [1] : vector<2x32x128xf32> to vector<2x128xf32>
    %c2 = arith.constant 2 : index
    %c0_12 = arith.constant 0 : index
    %34 = vector.load %arg8[%c2, %c0_12] : memref<6x128xf32, #tpu.memory_space<vmem>>, vector<2x128xf32>
    %35 = arith.maximumf %34, %33 : vector<2x128xf32>
    %c2_13 = arith.constant 2 : index
    %c0_14 = arith.constant 0 : index
    %36 = vector.load %arg8[%c2_13, %c0_14] : memref<6x128xf32, #tpu.memory_space<vmem>>, vector<2x128xf32>
    tpu.vector_store %arg8[%c2_13, %c0_14], %35 {strides = array<i32>} : memref<6x128xf32, #tpu.memory_space<vmem>>, vector<2x128xf32>,
    %c168_i32_15 = arith.constant 168 : i32
    %37 = vector.broadcast %c168_i32_15 : i32 to vector<32x1xi32>
    %38 = arith.cmpi sge, %7, %37 : vector<32x1xi32>
    %c170_i32 = arith.constant 170 : i32
    %39 = vector.broadcast %c170_i32 : i32 to vector<32x1xi32>
    %40 = arith.cmpi slt, %7, %39 : vector<32x1xi32>
    %41 = arith.andi %38, %40 : vector<32x1xi1>
    %42 = vector.shape_cast %41 : vector<32x1xi1> to vector<1x32x1xi1>
    %cst_16 = arith.constant 0xFF800000 : f32
    %43 = vector.shape_cast %42 : vector<1x32x1xi1> to vector<1x32x1xi1>
    %44 = vector.broadcast %43 : vector<1x32x1xi1> to vector<2x32x128xi1>
    %45 = vector.broadcast %cst_16 : f32 to vector<2x32x128xf32>
    %46 = arith.select %44, %8, %45 : vector<2x32x128xi1>, vector<2x32x128xf32>
    %cst_17 = arith.constant dense<0xFF800000> : vector<2x128xf32>
    %47 = vector.multi_reduction <maximumf>, %46, %cst_17 [1] : vector<2x32x128xf32> to vector<2x128xf32>
    %c4 = arith.constant 4 : index
    %c0_18 = arith.constant 0 : index
    %48 = vector.load %arg8[%c4, %c0_18] : memref<6x128xf32, #tpu.memory_space<vmem>>, vector<2x128xf32>
    %49 = arith.maximumf %48, %47 : vector<2x128xf32>
    %c4_19 = arith.constant 4 : index
    %c0_20 = arith.constant 0 : index
    %50 = vector.load %arg8[%c4_19, %c0_20] : memref<6x128xf32, #tpu.memory_space<vmem>>, vector<2x128xf32>
    tpu.vector_store %arg8[%c4_19, %c0_20], %49 {strides = array<i32>} : memref<6x128xf32, #tpu.memory_space<vmem>>, vector<2x128xf32>,
    %c1_i32 = arith.constant 1 : i32
    %51 = arith.cmpi eq, %arg0, %c1_i32 : i32
    %52 = arith.extui %51 : i1 to i32
    %c0_i32_21 = arith.constant 0 : i32
    %53 = arith.cmpi ne, %52, %c0_i32_21 : i32
    scf.if %53 {
      %c0_22 = arith.constant 0 : index
      %c0_23 = arith.constant 0 : index
      %54 = vector.load %arg8[%c0_22, %c0_23] : memref<6x128xf32, #tpu.memory_space<vmem>>, vector<2x128xf32>
      %c0_24 = arith.constant 0 : index
      %c0_25 = arith.constant 0 : index
      %55 = vector.load %arg2[%c0_24, %c0_25] : memref<3x128xf32, #tpu.memory_space<vmem>>, vector<1x128xf32>
      %56 = vector.broadcast %55 : vector<1x128xf32> to vector<2x128xf32>
      %57 = arith.addf %54, %56 : vector<2x128xf32>
      %c2_26 = arith.constant 2 : index
      %c0_27 = arith.constant 0 : index
      %58 = vector.load %arg8[%c2_26, %c0_27] : memref<6x128xf32, #tpu.memory_space<vmem>>, vector<2x128xf32>
      %c1 = arith.constant 1 : index
      %c0_28 = arith.constant 0 : index
      %59 = vector.load %arg2[%c1, %c0_28] : memref<3x128xf32, #tpu.memory_space<vmem>>, vector<1x128xf32>
      %60 = vector.broadcast %59 : vector<1x128xf32> to vector<2x128xf32>
      %61 = arith.addf %58, %60 : vector<2x128xf32>
      %c4_29 = arith.constant 4 : index
      %c0_30 = arith.constant 0 : index
      %62 = vector.load %arg8[%c4_29, %c0_30] : memref<6x128xf32, #tpu.memory_space<vmem>>, vector<2x128xf32>
      %c2_31 = arith.constant 2 : index
      %c0_32 = arith.constant 0 : index
      %63 = vector.load %arg2[%c2_31, %c0_32] : memref<3x128xf32, #tpu.memory_space<vmem>>, vector<1x128xf32>
      %64 = vector.broadcast %63 : vector<1x128xf32> to vector<2x128xf32>
      %65 = arith.addf %62, %64 : vector<2x128xf32>
      %66 = tpu.concatenate %57, %61, %65 in 0 : vector<2x128xf32>, vector<2x128xf32>, vector<2x128xf32> -> vector<6x128xf32>
      %c0_33 = arith.constant 0 : index
      %c0_34 = arith.constant 0 : index
      %67 = vector.load %arg3[%c0_33, %c0_34] : memref<128x128xf32, #tpu.memory_space<vmem>>, vector<128x128xf32>
      %cst_35 = arith.constant dense<0.000000e+00> : vector<6x128xf32>
      %68 = tpu.matmul %66, %67, %cst_35 {dimension_numbers = #tpu.dot_dimension_numbers<[1], [0], [0], [1], [0, 0, 1, 1], [], []>} : vector<6x128xf32>, vector<128x128xf32>, vector<6x128xf32> -> vector<6x128xf32>
      %c0_36 = arith.constant 0 : index
      %c0_37 = arith.constant 0 : index
      %69 = vector.load %arg4[%c0_36, %c0_37] : memref<1x128xf32, #tpu.memory_space<vmem>>, vector<1x128xf32>
      %70 = vector.broadcast %69 : vector<1x128xf32> to vector<6x128xf32>
      %71 = arith.addf %68, %70 : vector<6x128xf32>
      %cst_38 = arith.constant 0.000000e+00 : f32
      %72 = vector.broadcast %cst_38 : f32 to vector<6x128xf32>
      %73 = arith.cmpf oge, %71, %72 : vector<6x128xf32>
      %cst_39 = arith.constant 2.000000e-02 : f32
      %74 = vector.broadcast %cst_39 : f32 to vector<6x128xf32>
      %75 = arith.mulf %74, %71 : vector<6x128xf32>
      %76 = arith.select %73, %71, %75 : vector<6x128xi1>, vector<6x128xf32>
      %cst_40 = arith.constant dense<0.000000e+00> : vector<6xf32>
      %77 = vector.multi_reduction <add>, %76, %cst_40 [1] : vector<6x128xf32> to vector<6xf32>
      %78 = vector.shape_cast %77 : vector<6xf32> to vector<6x1xf32>
      %cst_41 = arith.constant 1.280000e+02 : f32
      %79 = vector.broadcast %cst_41 : f32 to vector<6x1xf32>
      %80 = arith.divf %78, %79 : vector<6x1xf32>
      %81 = vector.broadcast %80 : vector<6x1xf32> to vector<6x128xf32>
      %82 = arith.subf %76, %81 : vector<6x128xf32>
      %83 = arith.mulf %82, %82 : vector<6x128xf32>
      %cst_42 = arith.constant dense<0.000000e+00> : vector<6xf32>
      %84 = vector.multi_reduction <add>, %83, %cst_42 [1] : vector<6x128xf32> to vector<6xf32>
      %85 = vector.shape_cast %84 : vector<6xf32> to vector<6x1xf32>
      %cst_43 = arith.constant 1.280000e+02 : f32
      %86 = vector.broadcast %cst_43 : f32 to vector<6x1xf32>
      %87 = arith.divf %85, %86 : vector<6x1xf32>
      %88 = vector.broadcast %80 : vector<6x1xf32> to vector<6x128xf32>
      %89 = arith.subf %76, %88 : vector<6x128xf32>
      %cst_44 = arith.constant 9.99999974E-6 : f32
      %90 = vector.broadcast %cst_44 : f32 to vector<6x1xf32>
      %91 = arith.addf %87, %90 : vector<6x1xf32>
      %92 = math.rsqrt %91 : vector<6x1xf32>
      %93 = vector.broadcast %92 : vector<6x1xf32> to vector<6x128xf32>
      %94 = arith.mulf %89, %93 : vector<6x128xf32>
      %c0_45 = arith.constant 0 : index
      %c0_46 = arith.constant 0 : index
      %95 = vector.load %arg5[%c0_45, %c0_46] : memref<1x128xf32, #tpu.memory_space<vmem>>, vector<1x128xf32>
      %96 = vector.broadcast %95 : vector<1x128xf32> to vector<6x128xf32>
      %97 = arith.mulf %94, %96 : vector<6x128xf32>
      %c0_47 = arith.constant 0 : index
      %c0_48 = arith.constant 0 : index
      %98 = vector.load %arg6[%c0_47, %c0_48] : memref<1x128xf32, #tpu.memory_space<vmem>>, vector<1x128xf32>
      %99 = vector.broadcast %98 : vector<1x128xf32> to vector<6x128xf32>
      %100 = arith.addf %97, %99 : vector<6x128xf32>
      %c0_49 = arith.constant 0 : index
      %c0_50 = arith.constant 0 : index
      %101 = vector.load %arg7[%c0_49, %c0_50] : memref<6x128xf32, #tpu.memory_space<vmem>>, vector<6x128xf32>
      tpu.vector_store %arg7[%c0_49, %c0_50], %100 {strides = array<i32>} : memref<6x128xf32, #tpu.memory_space<vmem>>, vector<6x128xf32>,
    } else {
    }
    return
  }
  func.func @transform_0(%arg0: i32) -> (i32, i32, i32) {
    %c4_i32 = arith.constant 4 : i32
    %0 = arith.addi %c4_i32, %arg0 : i32
    %c0_i32 = arith.constant 0 : i32
    %c0_i32_0 = arith.constant 0 : i32
    %c0_i32_1 = arith.constant 0 : i32
    return %c0_i32, %0, %c0_i32_0 : i32, i32, i32
  }
  func.func @transform_1(%arg0: i32) -> (i32, i32) {
    %c0_i32 = arith.constant 0 : i32
    %c0_i32_0 = arith.constant 0 : i32
    %c0_i32_1 = arith.constant 0 : i32
    return %c0_i32, %c0_i32_0 : i32, i32
  }
  func.func @transform_2(%arg0: i32) -> (i32, i32) {
    %c0_i32 = arith.constant 0 : i32
    %c0_i32_0 = arith.constant 0 : i32
    %c0_i32_1 = arith.constant 0 : i32
    return %c0_i32, %c0_i32_0 : i32, i32
  }
  func.func @transform_3(%arg0: i32) -> (i32, i32) {
    %c0_i32 = arith.constant 0 : i32
    %c0_i32_0 = arith.constant 0 : i32
    %c0_i32_1 = arith.constant 0 : i32
    return %c0_i32, %c0_i32_0 : i32, i32
  }
  func.func @transform_4(%arg0: i32) -> (i32, i32) {
    %c0_i32 = arith.constant 0 : i32
    %c0_i32_0 = arith.constant 0 : i32
    %c0_i32_1 = arith.constant 0 : i32
    return %c0_i32, %c0_i32_0 : i32, i32
  }
  func.func @transform_5(%arg0: i32) -> (i32, i32) {
    %c0_i32 = arith.constant 0 : i32
    %c0_i32_0 = arith.constant 0 : i32
    %c0_i32_1 = arith.constant 0 : i32
    return %c0_i32, %c0_i32_0 : i32, i32
  }
  func.func @transform_6(%arg0: i32) -> (i32, i32) {
    %c0_i32 = arith.constant 0 : i32
    %c0_i32_0 = arith.constant 0 : i32
    %c0_i32_1 = arith.constant 0 : i32
    return %c0_i32, %c0_i32_0 : i32, i32
  }
}

</mosaic_0001>

<llo_original>
// kernel: tpu_custom_call.1
$region0: #{tpu_custom_call.1}
  #allocation0 [shape = 'u32[]', space=smem, size = 0x4, offset = 0x4, fixed_abs, tag = 'smem constant byte address 0x4 - core index']
  #allocation1 [shape = 'u32[144,128]{1,0:T(1,128)}', space=vmem, size = 0x12000, scoped, tag = 'internal scratch']
  #allocation2 [shape = 'f32[6,128]{1,0:T(8,128)}', space=vmem, size = 0x1000, scoped, tag = 'scratch operand']
  %s0 = inlined_call_operand.vmem [shape: f32[2,170,128], index: 0, kind: input, shape index: {}]
  %s1 = inlined_call_operand.vmem [shape: f32[3,128], index: 1, kind: input, shape index: {}]
  %s2 = inlined_call_operand.vmem [shape: f32[128,128], index: 2, kind: input, shape index: {}]
  %s3 = inlined_call_operand.vmem [shape: f32[1,128], index: 3, kind: input, shape index: {}]
  %s4 = inlined_call_operand.vmem [shape: f32[1,128], index: 4, kind: input, shape index: {}]
  %s5 = inlined_call_operand.vmem [shape: f32[1,128], index: 5, kind: input, shape index: {}]
  %s6 = inlined_call_operand.hbm [shape: f32[6,128], index: 6, kind: output, shape index: {}]
  %s7 = sld [smem:[#allocation0]]
  $region117: #{tpu_custom_call.1} parent=0
    _
  %s9 = ssub.s32 1, %s7
  %s10 = scalar_select 0, %s9, %s7
  $region1: #{tpu_custom_call.1} parent=0
    #allocation3 [shape = 'u8[65536]{0}', space=vmem, size = 0x10000, scoped, tag = 'input window, operand 0']
    #allocation4 [shape = 'u8[4096]{0}', space=vmem, size = 0x1000, scoped, tag = 'output window, operand 0, single buffered']
    #allocation5 [shape = 's32[2]{0}', space=sflag, size = 0x8, scoped, tag = 'scoped memory for tpu_custom_call.1']
    %11 = vsyncpa [#allocation5], 0
    loop: start=0, step=1, limit=4
    $region2: #{tpu_custom_call.1} parent=1 // loop_pre_header
      _
    $region3: #{tpu_custom_call.1} parent=1 // loop_header
      %s13 = sphi 0, %s17
      %p14 = scmp.ge.s32.totalorder %s13, 4
      %s25 = sphi 0, %s27
      %s28 = sphi 0, %s25
      %s29 = sphi 0, %s28
      %s45 = sphi 0, %s29
      %s49 = sphi 0, %s49
      %s51 = sphi 0, %s49
      %s52 = sphi 0, %s51
      %s66 = sphi 0, %s52
      %s70 = sphi 0, %s70
      %s72 = sphi 0, %s70
      %s73 = sphi 0, %s72
      %s87 = sphi 0, %s73
      %s91 = sphi 0, %s91
      %s93 = sphi 0, %s91
      %s94 = sphi 0, %s93
      %s108 = sphi 0, %s94
      %s112 = sphi 0, %s112
      %s114 = sphi 0, %s112
      %s115 = sphi 0, %s114
      %s129 = sphi 0, %s115
      %s133 = sphi 0, %s133
      %s135 = sphi 0, %s133
      %s136 = sphi 0, %s135
      %s150 = sphi 0, %s136
      %s154 = sphi 0, %s154
      %s156 = sphi 0, %s154
      %s157 = sphi 0, %s156
      %s171 = sphi 0, %s157
    $region4: #{tpu_custom_call.1} parent=1 // loop_header_branch
      %16 = sbr.rel (%p14) target = $region8
    $region5: #{tpu_custom_call.1} parent=1 // loop_body
      %s18 = ssub.s32 %s13, 1
      %s19 = ssub.s32 %s13, 2
      %s20 = sadd.s32 %s13, 1
      %s21 = sadd.s32 %s13, 4
      %s22 = sadd.s32 %s20, 4
      %s23 = ssub.s32 %s21, %s22
      %p24 = scmp.eq.s32.totalorder %s23, 0
      %s26 = sadd.s32 %s25, 1
      %s27 = scalar_select %p24, %s25, %s26
      %p30 = pneg %p24
      %p31 = scmp.eq.s32.totalorder %s13, 1
      %p32 = por %p30, %p31
      %p33 = scmp.ne.s32.totalorder %s25, %s28
      %p34 = scmp.eq.s32.totalorder %s13, 0
      %p35 = por %p33, %p34
      %p36 = scmp.ne.s32.totalorder %s25, %s28
      %p37 = scmp.eq.s32.totalorder %s18, 1
      %p38 = por %p36, %p37
      %p39 = scmp.ne.s32.totalorder %s28, %s29
      %p40 = scmp.eq.s32.totalorder %s18, 0
      %p41 = por %p39, %p40
      %p42 = scmp.ne.s32.totalorder %s28, %s29
      %p43 = scmp.eq.s32.totalorder %s19, 1
      %p44 = por %p42, %p43
      %p46 = scmp.ne.s32.totalorder %s29, %s45
      %p47 = scmp.eq.s32.totalorder %s19, 0
      %p48 = por %p46, %p47
      %s50 = sadd.s32 %s49, 1
      %p53 = scmp.eq.s32.totalorder %s13, 1
      %p54 = scmp.ne.s32.totalorder %s49, %s51
      %p55 = scmp.eq.s32.totalorder %s13, 0
      %p56 = por %p54, %p55
      %p57 = scmp.ne.s32.totalorder %s49, %s51
      %p58 = scmp.eq.s32.totalorder %s18, 1
      %p59 = por %p57, %p58
      %p60 = scmp.ne.s32.totalorder %s51, %s52
      %p61 = scmp.eq.s32.totalorder %s18, 0
      %p62 = por %p60, %p61
      %p63 = scmp.ne.s32.totalorder %s51, %s52
      %p64 = scmp.eq.s32.totalorder %s19, 1
      %p65 = por %p63, %p64
      %p67 = scmp.ne.s32.totalorder %s52, %s66
      %p68 = scmp.eq.s32.totalorder %s19, 0
      %p69 = por %p67, %p68
      %s71 = sadd.s32 %s70, 1
      %p74 = scmp.eq.s32.totalorder %s13, 1
      %p75 = scmp.ne.s32.totalorder %s70, %s72
      %p76 = scmp.eq.s32.totalorder %s13, 0
      %p77 = por %p75, %p76
      %p78 = scmp.ne.s32.totalorder %s70, %s72
      %p79 = scmp.eq.s32.totalorder %s18, 1
      %p80 = por %p78, %p79
      %p81 = scmp.ne.s32.totalorder %s72, %s73
      %p82 = scmp.eq.s32.totalorder %s18, 0
      %p83 = por %p81, %p82
      %p84 = scmp.ne.s32.totalorder %s72, %s73
      %p85 = scmp.eq.s32.totalorder %s19, 1
      %p86 = por %p84, %p85
      %p88 = scmp.ne.s32.totalorder %s73, %s87
      %p89 = scmp.eq.s32.totalorder %s19, 0
      %p90 = por %p88, %p89
      %s92 = sadd.s32 %s91, 1
      %p95 = scmp.eq.s32.totalorder %s13, 1
      %p96 = scmp.ne.s32.totalorder %s91, %s93
      %p97 = scmp.eq.s32.totalorder %s13, 0
      %p98 = por %p96, %p97
      %p99 = scmp.ne.s32.totalorder %s91, %s93
      %p100 = scmp.eq.s32.totalorder %s18, 1
      %p101 = por %p99, %p100
      %p102 = scmp.ne.s32.totalorder %s93, %s94
      %p103 = scmp.eq.s32.totalorder %s18, 0
      %p104 = por %p102, %p103
      %p105 = scmp.ne.s32.totalorder %s93, %s94
      %p106 = scmp.eq.s32.totalorder %s19, 1
      %p107 = por %p105, %p106
      %p109 = scmp.ne.s32.totalorder %s94, %s108
      %p110 = scmp.eq.s32.totalorder %s19, 0
      %p111 = por %p109, %p110
      %s113 = sadd.s32 %s112, 1
      %p116 = scmp.eq.s32.totalorder %s13, 1
      %p117 = scmp.ne.s32.totalorder %s112, %s114
      %p118 = scmp.eq.s32.totalorder %s13, 0
      %p119 = por %p117, %p118
      %p120 = scmp.ne.s32.totalorder %s112, %s114
      %p121 = scmp.eq.s32.totalorder %s18, 1
      %p122 = por %p120, %p121
      %p123 = scmp.ne.s32.totalorder %s114, %s115
      %p124 = scmp.eq.s32.totalorder %s18, 0
      %p125 = por %p123, %p124
      %p126 = scmp.ne.s32.totalorder %s114, %s115
      %p127 = scmp.eq.s32.totalorder %s19, 1
      %p128 = por %p126, %p127
      %p130 = scmp.ne.s32.totalorder %s115, %s129
      %p131 = scmp.eq.s32.totalorder %s19, 0
      %p132 = por %p130, %p131
      %s134 = sadd.s32 %s133, 1
      %p137 = scmp.eq.s32.totalorder %s13, 1
      %p138 = scmp.ne.s32.totalorder %s133, %s135
      %p139 = scmp.eq.s32.totalorder %s13, 0
      %p140 = por %p138, %p139
      %p141 = scmp.ne.s32.totalorder %s133, %s135
      %p142 = scmp.eq.s32.totalorder %s18, 1
      %p143 = por %p141, %p142
      %p144 = scmp.ne.s32.totalorder %s135, %s136
      %p145 = scmp.eq.s32.totalorder %s18, 0
      %p146 = por %p144, %p145
      %p147 = scmp.ne.s32.totalorder %s135, %s136
      %p148 = scmp.eq.s32.totalorder %s19, 1
      %p149 = por %p147, %p148
      %p151 = scmp.ne.s32.totalorder %s136, %s150
      %p152 = scmp.eq.s32.totalorder %s19, 0
      %p153 = por %p151, %p152
      %s155 = sadd.s32 %s154, 1
      %p158 = scmp.eq.s32.totalorder %s13, 1
      %p159 = scmp.ne.s32.totalorder %s154, %s156
      %p160 = scmp.eq.s32.totalorder %s13, 0
      %p161 = por %p159, %p160
      %p162 = scmp.ne.s32.totalorder %s154, %s156
      %p163 = scmp.eq.s32.totalorder %s18, 1
      %p164 = por %p162, %p163
      %p165 = scmp.ne.s32.totalorder %s156, %s157
      %p166 = scmp.eq.s32.totalorder %s18, 0
      %p167 = por %p165, %p166
      %p168 = scmp.ne.s32.totalorder %s156, %s157
      %p169 = scmp.eq.s32.totalorder %s19, 1
      %p170 = por %p168, %p169
      %p172 = scmp.ne.s32.totalorder %s157, %s171
      %p173 = scmp.eq.s32.totalorder %s19, 0
      %p174 = por %p172, %p173
      %p175 = scmp.le.s32.totalorder 1, %s13
      %p176 = scmp.lt.s32.totalorder %s13, 3
      %p177 = pnand %p175, %p176
      %p178 = pneg %p177
      // Predicated region
      $region9: #{tpu_custom_call.1} parent=5 // pred_check
        _
      $region10: #{tpu_custom_call.1} parent=5 // pred_check_branch
        %180 = sbr.rel (%p177) target = $region12
      $region11: #{tpu_custom_call.1} parent=5 // pred_region
        %s181 = ssub.s32 %s13, 1
        // Predicated region
        $region13: #{tpu_custom_call.1} parent=11 // pred_check
          %p182 = pneg %p62
        $region14: #{tpu_custom_call.1} parent=11 // pred_check_branch
          %184 = sbr.rel (%p182) target = $region16
        $region15: #{tpu_custom_call.1} parent=11 // pred_region
          _
        $region16: #{tpu_custom_call.1} parent=11 // pred_fallthru
          _
        // Predicated region
        $region17: #{tpu_custom_call.1} parent=11 // pred_check
          %p185 = pneg %p83
        $region18: #{tpu_custom_call.1} parent=11 // pred_check_branch
          %187 = sbr.rel (%p185) target = $region20
        $region19: #{tpu_custom_call.1} parent=11 // pred_region
          _
        $region20: #{tpu_custom_call.1} parent=11 // pred_fallthru
          _
        // Predicated region
        $region21: #{tpu_custom_call.1} parent=11 // pred_check
          %p188 = pneg %p104
        $region22: #{tpu_custom_call.1} parent=11 // pred_check_branch
          %190 = sbr.rel (%p188) target = $region24
        $region23: #{tpu_custom_call.1} parent=11 // pred_region
          _
        $region24: #{tpu_custom_call.1} parent=11 // pred_fallthru
          _
        // Predicated region
        $region25: #{tpu_custom_call.1} parent=11 // pred_check
          %p191 = pneg %p125
        $region26: #{tpu_custom_call.1} parent=11 // pred_check_branch
          %193 = sbr.rel (%p191) target = $region28
        $region27: #{tpu_custom_call.1} parent=11 // pred_region
          _
        $region28: #{tpu_custom_call.1} parent=11 // pred_fallthru
          _
        // Predicated region
        $region29: #{tpu_custom_call.1} parent=11 // pred_check
          %p194 = pneg %p146
        $region30: #{tpu_custom_call.1} parent=11 // pred_check_branch
          %196 = sbr.rel (%p194) target = $region32
        $region31: #{tpu_custom_call.1} parent=11 // pred_region
          _
        $region32: #{tpu_custom_call.1} parent=11 // pred_fallthru
          _
      $region12: #{tpu_custom_call.1} parent=5 // pred_fallthru
        _
      %p197 = scmp.lt.s32.totalorder %s13, 2
      // Predicated region
      $region33: #{tpu_custom_call.1} parent=5 // pred_check
        %p198 = pneg %p197
      $region34: #{tpu_custom_call.1} parent=5 // pred_check_branch
        %200 = sbr.rel (%p198) target = $region36
      $region35: #{tpu_custom_call.1} parent=5 // pred_region
        // Predicated region
        $region37: #{tpu_custom_call.1} parent=35 // pred_check
          %p201 = pneg %p35
        $region38: #{tpu_custom_call.1} parent=35 // pred_check_branch
          %203 = sbr.rel (%p201) target = $region40
        $region39: #{tpu_custom_call.1} parent=35 // pred_region
          %s204 = sand.u32 %s25, 1
          %s205 = sand.u32 %s25, 1
          %s206 = smul.addr %s205, 64
          %s207 = scalar_lea.vmem [#allocation3], %s206
          %s208 = sadd.s32 %s13, 4
          %s209 = smul.u32 4, %s208
          %s210 = ssub.s32 22, %s209
          %p211 = scmp.lt.s32.totalorder %s210, 4
          %s212 = scalar_select %p211, %s210, 4
          %s213 = smul.u32 256, %s212
          %p214 = scmp.ne.s32.totalorder 0, %s213
          %s215 = smul.addr %s209, 8
          %s216 = scalar_lea.vmem %s0, %s215
          // Predicated region
          $region41: #{tpu_custom_call.1} parent=39 // pred_check
            %p217 = pneg %p214
          $region42: #{tpu_custom_call.1} parent=39 // pred_check_branch
            %219 = sbr.rel (%p217) target = $region44
          $region43: #{tpu_custom_call.1} parent=39 // pred_region
            // Predicated region
            $region45: #{tpu_custom_call.1} parent=43 // pred_check
              _
            $region46: #{tpu_custom_call.1} parent=43 // pred_check_branch
              %221 = sbr.rel (0) target = $region48
            $region47: #{tpu_custom_call.1} parent=43 // pred_region
              // Predicated region
              $region67: #{tpu_custom_call.1} parent=47 // pred_check
                _
              $region68: #{tpu_custom_call.1} parent=47 // pred_check_branch
                %286 = sbr.rel (0) target = $region70
              $region69: #{tpu_custom_call.1} parent=47 // pred_region
                %s287 = sshrl.u32 %s212, 2
                // While loop
                $region71: #{tpu_custom_call.1} parent=69 // loop_pre_header
                  _
                $region72: #{tpu_custom_call.1} parent=69 // loop_header
                  %s289 = sphi 0, %s291
                  %p290 = scmp.ge.s32.totalorder %s289, %s287
                  %s294 = sphi 0, %s315
                  %s295 = sphi %s216, %s318
                  %s296 = sphi %s207, %s319
                $region73: #{tpu_custom_call.1} parent=69 // loop_header_branch
                  %293 = sbr.rel (%p290) target = $region77
                $region74: #{tpu_custom_call.1} parent=69 // loop_body
                  %v297 = vld [vmem:[%s295] sm:$0xff]
                  %298 = vst [vmem:[%s296] sm:$0xff] %v297
                  %v299 = vld [vmem:[%s295 + $0x8] sm:$0xff]
                  %300 = vst [vmem:[%s296 + $0x8] sm:$0xff] %v299
                  %v301 = vld [vmem:[%s295 + $0x10] sm:$0xff]
                  %302 = vst [vmem:[%s296 + $0x10] sm:$0xff] %v301
                  %v303 = vld [vmem:[%s295 + $0x18] sm:$0xff]
                  %304 = vst [vmem:[%s296 + $0x18] sm:$0xff] %v303
                  %v305 = vld [vmem:[%s295 + $0xb0] sm:$0xff]
                  %306 = vst [vmem:[%s296 + $0x20] sm:$0xff] %v305
                  %v307 = vld [vmem:[%s295 + $0xb8] sm:$0xff]
                  %308 = vst [vmem:[%s296 + $0x28] sm:$0xff] %v307
                  %v309 = vld [vmem:[%s295 + $0xc0] sm:$0xff]
                  %310 = vst [vmem:[%s296 + $0x30] sm:$0xff] %v309
                  %v311 = vld [vmem:[%s295 + $0xc8] sm:$0xff]
                  %312 = vst [vmem:[%s296 + $0x38] sm:$0xff] %v311
                  %s313 = sadd.s32 1, %s294
                  %p314 = scmp.ge.s32.totalorder %s313, %s287
                  %s315 = scalar_select %p314, 0, %s313
                  %s316 = smul.u32 %s315, 32
                  %s317 = smul.u32 %s315, 32
                  %s318 = scalar_lea.vmem %s216, %s316
                  %s319 = scalar_lea.vmem %s207, %s317 [#allocation3]
                $region75: #{tpu_custom_call.1} parent=69 // loop_footer
                  %s291 = sadd.s32 %s289, 1
                $region76: #{tpu_custom_call.1} parent=69 // loop_footer_branch
                  %288 = sbr.rel target = $region72
                $region77: #{tpu_custom_call.1} parent=69 // loop_exit
                  _
                %s320 = sshrl.u32 %s212, 2
                %s321 = sand.u32 %s212, 3
                %s322 = smul.u32 %s320, 4
                %s323 = smul.u32 8, %s322
                %s324 = scalar_lea.vmem %s216, %s323
                %s325 = smul.u32 8, %s322
                %s326 = scalar_lea.vmem %s207, %s325 [#allocation3]
                // While loop
                $region78: #{tpu_custom_call.1} parent=69 // loop_pre_header
                  _
                $region79: #{tpu_custom_call.1} parent=69 // loop_header
                  %s328 = sphi 0, %s330
                  %p329 = scmp.ge.s32.totalorder %s328, %s321
                  %s333 = sphi 0, %s342
                  %s334 = sphi %s324, %s345
                  %s335 = sphi %s326, %s346
                $region80: #{tpu_custom_call.1} parent=69 // loop_header_branch
                  %332 = sbr.rel (%p329) target = $region84
                $region81: #{tpu_custom_call.1} parent=69 // loop_body
                  %v336 = vld [vmem:[%s334] sm:$0xff]
                  %337 = vst [vmem:[%s335] sm:$0xff] %v336
                  %v338 = vld [vmem:[%s334 + $0xb0] sm:$0xff]
                  %339 = vst [vmem:[%s335 + $0x20] sm:$0xff] %v338
                  %s340 = sadd.s32 1, %s333
                  %p341 = scmp.ge.s32.totalorder %s340, %s321
                  %s342 = scalar_select %p341, 0, %s340
                  %s343 = smul.u32 %s342, 8
                  %s344 = smul.u32 %s342, 8
                  %s345 = scalar_lea.vmem %s324, %s343
                  %s346 = scalar_lea.vmem %s326, %s344 [#allocation3]
                $region82: #{tpu_custom_call.1} parent=69 // loop_footer
                  %s330 = sadd.s32 %s328, 1
                $region83: #{tpu_custom_call.1} parent=69 // loop_footer_branch
                  %327 = sbr.rel target = $region79
                $region84: #{tpu_custom_call.1} parent=69 // loop_exit
                  _
              $region70: #{tpu_custom_call.1} parent=47 // pred_fallthru
                _
              // Predicated region
              $region85: #{tpu_custom_call.1} parent=47 // pred_check
                _
              $region86: #{tpu_custom_call.1} parent=47 // pred_check_branch
                %348 = sbr.rel target = $region88
              $region87: #{tpu_custom_call.1} parent=47 // pred_region
                _
              $region88: #{tpu_custom_call.1} parent=47 // pred_fallthru
                _
            $region48: #{tpu_custom_call.1} parent=43 // pred_fallthru
              _
            // Predicated region
            $region49: #{tpu_custom_call.1} parent=43 // pred_check
              _
            $region50: #{tpu_custom_call.1} parent=43 // pred_check_branch
              %223 = sbr.rel target = $region52
            $region51: #{tpu_custom_call.1} parent=43 // pred_region
              %s225 = sshrl.u32 %s212, 2
              // While loop
              $region53: #{tpu_custom_call.1} parent=51 // loop_pre_header
                _
              $region54: #{tpu_custom_call.1} parent=51 // loop_header
                %s227 = sphi 0, %s229
                %p228 = scmp.ge.s32.totalorder %s227, %s225
                %s232 = sphi 0, %s253
                %s233 = sphi %s216, %s256
                %s234 = sphi %s207, %s257
              $region55: #{tpu_custom_call.1} parent=51 // loop_header_branch
                %231 = sbr.rel (%p228) target = $region59
              $region56: #{tpu_custom_call.1} parent=51 // loop_body
                %v235 = vld [vmem:[%s233] sm:$0xff]
                %236 = vst [vmem:[%s234] sm:$0xff] %v235
                %v237 = vld [vmem:[%s233 + $0x8] sm:$0xff]
                %238 = vst [vmem:[%s234 + $0x8] sm:$0xff] %v237
                %v239 = vld [vmem:[%s233 + $0x10] sm:$0xff]
                %240 = vst [vmem:[%s234 + $0x10] sm:$0xff] %v239
                %v241 = vld [vmem:[%s233 + $0x18] sm:$0xff]
                %242 = vst [vmem:[%s234 + $0x18] sm:$0xff] %v241
                %v243 = vld [vmem:[%s233 + $0xb0] sm:$0xff]
                %244 = vst [vmem:[%s234 + $0x20] sm:$0xff] %v243
                %v245 = vld [vmem:[%s233 + $0xb8] sm:$0xff]
                %246 = vst [vmem:[%s234 + $0x28] sm:$0xff] %v245
                %v247 = vld [vmem:[%s233 + $0xc0] sm:$0xff]
                %248 = vst [vmem:[%s234 + $0x30] sm:$0xff] %v247
                %v249 = vld [vmem:[%s233 + $0xc8] sm:$0xff]
                %250 = vst [vmem:[%s234 + $0x38] sm:$0xff] %v249
                %s251 = sadd.s32 1, %s232
                %p252 = scmp.ge.s32.totalorder %s251, %s225
                %s253 = scalar_select %p252, 0, %s251
                %s254 = smul.u32 %s253, 32
                %s255 = smul.u32 %s253, 32
                %s256 = scalar_lea.vmem %s216, %s254
                %s257 = scalar_lea.vmem %s207, %s255 [#allocation3]
              $region57: #{tpu_custom_call.1} parent=51 // loop_footer
                %s229 = sadd.s32 %s227, 1
              $region58: #{tpu_custom_call.1} parent=51 // loop_footer_branch
                %226 = sbr.rel target = $region54
              $region59: #{tpu_custom_call.1} parent=51 // loop_exit
                _
              %s258 = sshrl.u32 %s212, 2
              %s259 = sand.u32 %s212, 3
              %s260 = smul.u32 %s258, 4
              %s261 = smul.u32 8, %s260
              %s262 = scalar_lea.vmem %s216, %s261
              %s263 = smul.u32 8, %s260
              %s264 = scalar_lea.vmem %s207, %s263 [#allocation3]
              // While loop
              $region60: #{tpu_custom_call.1} parent=51 // loop_pre_header
                _
              $region61: #{tpu_custom_call.1} parent=51 // loop_header
                %s266 = sphi 0, %s268
                %p267 = scmp.ge.s32.totalorder %s266, %s259
                %s271 = sphi 0, %s280
                %s272 = sphi %s262, %s283
                %s273 = sphi %s264, %s284
              $region62: #{tpu_custom_call.1} parent=51 // loop_header_branch
                %270 = sbr.rel (%p267) target = $region66
              $region63: #{tpu_custom_call.1} parent=51 // loop_body
                %v274 = vld [vmem:[%s272] sm:$0xff]
                %275 = vst [vmem:[%s273] sm:$0xff] %v274
                %v276 = vld [vmem:[%s272 + $0xb0] sm:$0xff]
                %277 = vst [vmem:[%s273 + $0x20] sm:$0xff] %v276
                %s278 = sadd.s32 1, %s271
                %p279 = scmp.ge.s32.totalorder %s278, %s259
                %s280 = scalar_select %p279, 0, %s278
                %s281 = smul.u32 %s280, 8
                %s282 = smul.u32 %s280, 8
                %s283 = scalar_lea.vmem %s262, %s281
                %s284 = scalar_lea.vmem %s264, %s282 [#allocation3]
              $region64: #{tpu_custom_call.1} parent=51 // loop_footer
                %s268 = sadd.s32 %s266, 1
              $region65: #{tpu_custom_call.1} parent=51 // loop_footer_branch
                %265 = sbr.rel target = $region61
              $region66: #{tpu_custom_call.1} parent=51 // loop_exit
                _
            $region52: #{tpu_custom_call.1} parent=43 // pred_fallthru
              _
          $region44: #{tpu_custom_call.1} parent=39 // pred_fallthru
            _
          %349 = vnop
        $region40: #{tpu_custom_call.1} parent=35 // pred_fallthru
          _
      $region36: #{tpu_custom_call.1} parent=5 // pred_fallthru
        _
      %p350 = scmp.le.s32.totalorder 1, %s13
      %p351 = scmp.lt.s32.totalorder %s13, 3
      %p352 = pnand %p350, %p351
      %p353 = pneg %p352
      // Predicated region
      $region89: #{tpu_custom_call.1} parent=5 // pred_check
        _
      $region90: #{tpu_custom_call.1} parent=5 // pred_check_branch
        %355 = sbr.rel (%p352) target = $region92
      $region91: #{tpu_custom_call.1} parent=5 // pred_region
        %s356 = ssub.s32 %s13, 1
        %s357 = sand.u32 %s28, 1
        %s358 = sand.u32 %s28, 1
        %s359 = smul.addr %s358, 64
        %s360 = scalar_lea.vmem [#allocation3], %s359
        // Predicated region
        $region93: #{tpu_custom_call.1} parent=91 // pred_check
          %p361 = pneg %p41
        $region94: #{tpu_custom_call.1} parent=91 // pred_check_branch
          %363 = sbr.rel (%p361) target = $region96
        $region95: #{tpu_custom_call.1} parent=91 // pred_region
          _
        $region96: #{tpu_custom_call.1} parent=91 // pred_fallthru
          _
        %s364 = sand.u32 %s28, 1
        %s365 = sand.u32 %s28, 1
        %s366 = smul.addr %s365, 64
        %s367 = scalar_lea.vmem [#allocation3], %s366
        %p368 = pneg %p41
        %p369 = pneg %p38
        %p370 = pneg %p62
        %p371 = pneg %p59
        %p372 = pneg %p83
        %p373 = pneg %p80
        %p374 = pneg %p104
        %p375 = pneg %p101
        %p376 = pneg %p125
        %p377 = pneg %p122
        %p378 = pneg %p146
        %p379 = pneg %p143
        %p380 = pneg %p167
        %p381 = pneg %p164
        %s382 = sadd.s32 %s18, 4
        %s383 = smul.u32 4, %s382
        %s384 = ssub.s32 22, %s383
        %p385 = scmp.lt.s32.totalorder %s384, 4
        %s386 = scalar_select %p385, %s384, 4
        %s387 = smul.u32 256, %s386
        %p388 = scmp.eq.s32.totalorder %s18, 0
        // Predicated region
        $region97: #{tpu_custom_call.1} parent=91 // pred_check
          %p389 = pneg %p388
        $region98: #{tpu_custom_call.1} parent=91 // pred_check_branch
          %391 = sbr.rel (%p389) target = $region100
        $region99: #{tpu_custom_call.1} parent=91 // pred_region
          %392 = vst [vmem:[#allocation2] sm:$0x3f] -inf
        $region100: #{tpu_custom_call.1} parent=91 // pred_fallthru
          _
        %s393 = smul.u32 %s18, 32
        %s394 = sadd.s32 %s393, 128
        %v395 = vlaneseq
        %v396 = vshrl.u32 %v395, 7
        %v397 = vadd.s32 %v396, 8
        %v398 = vadd.s32 %v396, 16
        %v399 = vadd.s32 %v396, 24
        %v400 = vstv %s394
        %v401 = vadd.s32 %v400, %v396
        %v402 = vadd.s32 %v400, %v397
        %v403 = vadd.s32 %v400, %v398
        %v404 = vadd.s32 %v400, %v399
        %v405 = vld [vmem:[%s360] sm:$0xff]
        %v406 = vld [vmem:[%s360 + $0x8] sm:$0xff]
        %v407 = vld [vmem:[%s360 + $0x10] sm:$0xff]
        %v408 = vld [vmem:[%s360 + $0x18] sm:$0xff]
        %v409 = vld [vmem:[%s360 + $0x20] sm:$0xff]
        %v410 = vld [vmem:[%s360 + $0x28] sm:$0xff]
        %v411 = vld [vmem:[%s360 + $0x30] sm:$0xff]
        %v412 = vld [vmem:[%s360 + $0x38] sm:$0xff]
        %vm413 = vcmp.ge.s32.totalorder %v401, 128
        %vm414 = vcmp.ge.s32.totalorder %v402, 128
        %vm415 = vcmp.ge.s32.totalorder %v403, 128
        %vm416 = vcmp.ge.s32.totalorder %v404, 128
        %vm417 = vcmp.lt.s32.totalorder %v401, 160
        %vm418 = vcmp.lt.s32.totalorder %v402, 160
        %vm419 = vcmp.lt.s32.totalorder %v403, 160
        %vm420 = vcmp.lt.s32.totalorder %v404, 160
        %vm421 = vmand %vm413, %vm417
        %vm422 = vmand %vm414, %vm418
        %vm423 = vmand %vm415, %vm419
        %vm424 = vmand %vm416, %vm420
        %v425 = vsel %vm421, 1, 0
        %v426 = vsel %vm422, 1, 0
        %v427 = vsel %vm423, 1, 0
        %v428 = vsel %vm424, 1, 0
        %vm429 = vcmp.eq.s32.totalorder %v425, 1
        %vm430 = vcmp.eq.s32.totalorder %v426, 1
        %vm431 = vcmp.eq.s32.totalorder %v427, 1
        %vm432 = vcmp.eq.s32.totalorder %v428, 1
        %v433 = vsel %vm429, %v405, -inf
        %v434 = vsel %vm430, %v406, -inf
        %v435 = vsel %vm431, %v407, -inf
        %v436 = vsel %vm432, %v408, -inf
        %v437 = vsel %vm429, %v409, -inf
        %v438 = vsel %vm430, %v410, -inf
        %v439 = vsel %vm431, %v411, -inf
        %v440 = vsel %vm432, %v412, -inf
        %v441 = vmax.f32 %v433, %v435
        %v442 = vmax.f32 %v434, %v436
        %v443 = vmax.f32 %v441, %v442
        %v444 = vrot.slane %v443, 4
        %v445 = vmax.f32 %v443, %v444
        %v446 = vrot.slane %v445, 2
        %v447 = vmax.f32 %v445, %v446
        %v448 = vrot.slane %v447, 1
        %v449 = vmax.f32 %v447, %v448
        %v450 = vmax.f32 %v437, %v439
        %v451 = vmax.f32 %v438, %v440
        %v452 = vmax.f32 %v450, %v451
        %v453 = vrot.slane %v452, 4
        %v454 = vmax.f32 %v452, %v453
        %v455 = vrot.slane %v454, 2
        %v456 = vmax.f32 %v454, %v455
        %v457 = vrot.slane %v456, 1
        %v458 = vmax.f32 %v456, %v457
        %v459 = vld [vmem:[#allocation2] sm:$0x3]
        %vm462 = vcmask 1041409
        %v463 = vsel %vm462, %v458, %v449
        %v465 = vmax.f32 %v459, %v463
        %466 = vst [vmem:[#allocation2] sm:$0x3] %v465
        %vm467 = vcmp.ge.s32.totalorder %v401, 160
        %vm468 = vcmp.ge.s32.totalorder %v402, 160
        %vm469 = vcmp.ge.s32.totalorder %v403, 160
        %vm470 = vcmp.ge.s32.totalorder %v404, 160
        %vm471 = vcmp.lt.s32.totalorder %v401, 168
        %vm472 = vcmp.lt.s32.totalorder %v402, 168
        %vm473 = vcmp.lt.s32.totalorder %v403, 168
        %vm474 = vcmp.lt.s32.totalorder %v404, 168
        %vm475 = vmand %vm467, %vm471
        %vm476 = vmand %vm468, %vm472
        %vm477 = vmand %vm469, %vm473
        %vm478 = vmand %vm470, %vm474
        %v479 = vsel %vm475, 1, 0
        %v480 = vsel %vm476, 1, 0
        %v481 = vsel %vm477, 1, 0
        %v482 = vsel %vm478, 1, 0
        %vm483 = vcmp.eq.s32.totalorder %v479, 1
        %vm484 = vcmp.eq.s32.totalorder %v480, 1
        %vm485 = vcmp.eq.s32.totalorder %v481, 1
        %vm486 = vcmp.eq.s32.totalorder %v482, 1
        %v487 = vsel %vm483, %v405, -inf
        %v488 = vsel %vm484, %v406, -inf
        %v489 = vsel %vm485, %v407, -inf
        %v490 = vsel %vm486, %v408, -inf
        %v491 = vsel %vm483, %v409, -inf
        %v492 = vsel %vm484, %v410, -inf
        %v493 = vsel %vm485, %v411, -inf
        %v494 = vsel %vm486, %v412, -inf
        %v495 = vmax.f32 %v487, %v489
        %v496 = vmax.f32 %v488, %v490
        %v497 = vmax.f32 %v495, %v496
        %v498 = vrot.slane %v497, 4
        %v499 = vmax.f32 %v497, %v498
        %v500 = vrot.slane %v499, 2
        %v501 = vmax.f32 %v499, %v500
        %v502 = vrot.slane %v501, 1
        %v503 = vmax.f32 %v501, %v502
        %v504 = vmax.f32 %v491, %v493
        %v505 = vmax.f32 %v492, %v494
        %v506 = vmax.f32 %v504, %v505
        %v507 = vrot.slane %v506, 4
        %v508 = vmax.f32 %v506, %v507
        %v509 = vrot.slane %v508, 2
        %v510 = vmax.f32 %v508, %v509
        %v511 = vrot.slane %v510, 1
        %v512 = vmax.f32 %v510, %v511
        %v513 = vld [vmem:[#allocation2 + $0x2] sm:$0x3]
        %v516 = vsel %vm462, %v512, %v503
        %v518 = vmax.f32 %v513, %v516
        %519 = vst [vmem:[#allocation2 + $0x2] sm:$0x3] %v518
        %vm520 = vcmp.ge.s32.totalorder %v401, 168
        %vm521 = vcmp.ge.s32.totalorder %v402, 168
        %vm522 = vcmp.ge.s32.totalorder %v403, 168
        %vm523 = vcmp.ge.s32.totalorder %v404, 168
        %vm524 = vcmp.lt.s32.totalorder %v401, 170
        %vm525 = vcmp.lt.s32.totalorder %v402, 170
        %vm526 = vcmp.lt.s32.totalorder %v403, 170
        %vm527 = vcmp.lt.s32.totalorder %v404, 170
        %vm528 = vmand %vm520, %vm524
        %vm529 = vmand %vm521, %vm525
        %vm530 = vmand %vm522, %vm526
        %vm531 = vmand %vm523, %vm527
        %v532 = vsel %vm528, 1, 0
        %v533 = vsel %vm529, 1, 0
        %v534 = vsel %vm530, 1, 0
        %v535 = vsel %vm531, 1, 0
        %vm536 = vcmp.eq.s32.totalorder %v532, 1
        %vm537 = vcmp.eq.s32.totalorder %v533, 1
        %vm538 = vcmp.eq.s32.totalorder %v534, 1
        %vm539 = vcmp.eq.s32.totalorder %v535, 1
        %v540 = vsel %vm536, %v405, -inf
        %v541 = vsel %vm537, %v406, -inf
        %v542 = vsel %vm538, %v407, -inf
        %v543 = vsel %vm539, %v408, -inf
        %v544 = vsel %vm536, %v409, -inf
        %v545 = vsel %vm537, %v410, -inf
        %v546 = vsel %vm538, %v411, -inf
        %v547 = vsel %vm539, %v412, -inf
        %v548 = vmax.f32 %v540, %v542
        %v549 = vmax.f32 %v541, %v543
        %v550 = vmax.f32 %v548, %v549
        %v551 = vrot.slane %v550, 4
        %v552 = vmax.f32 %v550, %v551
        %v553 = vrot.slane %v552, 2
        %v554 = vmax.f32 %v552, %v553
        %v555 = vrot.slane %v554, 1
        %v556 = vmax.f32 %v554, %v555
        %v557 = vmax.f32 %v544, %v546
        %v558 = vmax.f32 %v545, %v547
        %v559 = vmax.f32 %v557, %v558
        %v560 = vrot.slane %v559, 4
        %v561 = vmax.f32 %v559, %v560
        %v562 = vrot.slane %v561, 2
        %v563 = vmax.f32 %v561, %v562
        %v564 = vrot.slane %v563, 1
        %v565 = vmax.f32 %v563, %v564
        %v566 = vld [vmem:[#allocation2 + $0x4] sm:$0x3]
        %v569 = vsel %vm462, %v565, %v556
        %v571 = vmax.f32 %v566, %v569
        %572 = vst [vmem:[#allocation2 + $0x4] sm:$0x3] %v571
        %p573 = scmp.eq.s32.totalorder %s18, 1
        // Predicated region
        $region101: #{tpu_custom_call.1} parent=91 // pred_check
          %p574 = pneg %p573
        $region102: #{tpu_custom_call.1} parent=91 // pred_check_branch
          %576 = sbr.rel (%p574) target = $region104
        $region103: #{tpu_custom_call.1} parent=91 // pred_region
          %v577 = vld [vmem:[#allocation2] sm:$0x3]
          %v578 = vld [vmem:[%s1] sm:$0x1]
          %v579 = vlaneseq
          %v580 = vshrl.u32 %v579, 7
          %v581 = vsub.s32 0, %v580
          %v582 = vrot.slane %v578, %v581
          %v583 = vadd.f32 %v577, %v582
          %v584 = vld [vmem:[#allocation2 + $0x2] sm:$0x3]
          %v585 = vld [vmem:[%s1 + $0x1] sm:$0x1]
          %v586 = vlaneseq
          %v587 = vshrl.u32 %v586, 7
          %v588 = vsub.s32 0, %v587
          %v589 = vrot.slane %v585, %v588
          %v590 = vadd.f32 %v584, %v589
          %v591 = vld [vmem:[#allocation2 + $0x4] sm:$0x3]
          %v592 = vld [vmem:[%s1 + $0x2] sm:$0x1]
          %v593 = vlaneseq
          %v594 = vshrl.u32 %v593, 7
          %v595 = vsub.s32 0, %v594
          %v596 = vrot.slane %v592, %v595
          %v597 = vadd.f32 %v591, %v596
          %v599 = vrot.slane %v590, 6
          %v602 = vrot.slane %v597, 4
          %vm604 = vcmask 1041408
          %v605 = vsel %vm604, %v583, %v599
          %vm606 = vcmask 1043456
          %v607 = vsel %vm606, %v605, %v602
          %v608 = vld [vmem:[%s2] sm:$0xff]
          %v609 = vld [vmem:[%s2 + $0x8] sm:$0xff]
          %v610 = vld [vmem:[%s2 + $0x10] sm:$0xff]
          %v611 = vld [vmem:[%s2 + $0x18] sm:$0xff]
          %v612 = vld [vmem:[%s2 + $0x20] sm:$0xff]
          %v613 = vld [vmem:[%s2 + $0x28] sm:$0xff]
          %v614 = vld [vmem:[%s2 + $0x30] sm:$0xff]
          %v615 = vld [vmem:[%s2 + $0x38] sm:$0xff]
          %v616 = vld [vmem:[%s2 + $0x40] sm:$0xff]
          %v617 = vld [vmem:[%s2 + $0x48] sm:$0xff]
          %v618 = vld [vmem:[%s2 + $0x50] sm:$0xff]
          %v619 = vld [vmem:[%s2 + $0x58] sm:$0xff]
          %v620 = vld [vmem:[%s2 + $0x60] sm:$0xff]
          %v621 = vld [vmem:[%s2 + $0x68] sm:$0xff]
          %v622 = vld [vmem:[%s2 + $0x70] sm:$0xff]
          %v623 = vld [vmem:[%s2 + $0x78] sm:$0xff]
          %v624 = vld [vmem:[%s3] sm:$0x1]
          %v626 = vlaneseq
          %v627 = vshrl.u32 %v626, 7
          %v628 = vsub.s32 0, %v627
          %v629 = vrot.slane %v624, %v628
          %631 = vmatprep.subr.mxu0 0.0
          %632 = vmatpush1.msra.mxu0 %v608
          %633 = vmatprep.subr.mxu0 0.0
          %634 = vmatpush1.msra.mxu0 %v609
          %635 = vmatprep.subr.mxu0 0.0
          %636 = vmatpush1.msra.mxu0 %v610
          %637 = vmatprep.subr.mxu0 0.0
          %638 = vmatpush1.msra.mxu0 %v611
          %639 = vmatprep.subr.mxu0 0.0
          %640 = vmatpush1.msra.mxu0 %v612
          %641 = vmatprep.subr.mxu0 0.0
          %642 = vmatpush1.msra.mxu0 %v613
          %643 = vmatprep.subr.mxu0 0.0
          %644 = vmatpush1.msra.mxu0 %v614
          %645 = vmatprep.subr.mxu0 0.0
          %646 = vmatpush1.msra.mxu0 %v615
          %647 = vmatprep.subr.mxu0 0.0
          %648 = vmatpush1.msra.mxu0 %v616
          %649 = vmatprep.subr.mxu0 0.0
          %650 = vmatpush1.msra.mxu0 %v617
          %651 = vmatprep.subr.mxu0 0.0
          %652 = vmatpush1.msra.mxu0 %v618
          %653 = vmatprep.subr.mxu0 0.0
          %654 = vmatpush1.msra.mxu0 %v619
          %655 = vmatprep.subr.mxu0 0.0
          %656 = vmatpush1.msra.mxu0 %v620
          %657 = vmatprep.subr.mxu0 0.0
          %658 = vmatpush1.msra.mxu0 %v621
          %659 = vmatprep.subr.mxu0 0.0
          %660 = vmatpush1.msra.mxu0 %v622
          %661 = vmatprep.subr.mxu0 0.0
          %662 = vmatpush1.msra.mxu0 %v623
          %663 = vmatprep.subr.mxu0 0.0
          %664 = vmatpush1.msra.mxu0 0.0
          %665 = vmatprep.subr.mxu0 0.0
          %666 = vmatpush1.msra.mxu0 0.0
          %667 = vmatprep.subr.mxu0 0.0
          %668 = vmatpush1.msra.mxu0 0.0
          %669 = vmatprep.subr.mxu0 0.0
          %670 = vmatpush1.msra.mxu0 0.0
          %671 = vmatprep.subr.mxu0 0.0
          %672 = vmatpush1.msra.mxu0 0.0
          %673 = vmatprep.subr.mxu0 0.0
          %674 = vmatpush1.msra.mxu0 0.0
          %675 = vmatprep.subr.mxu0 0.0
          %676 = vmatpush1.msra.mxu0 0.0
          %677 = vmatprep.subr.mxu0 0.0
          %678 = vmatpush1.msra.mxu0 0.0
          %679 = vmatprep.subr.mxu0 0.0
          %680 = vmatpush1.msra.mxu0 0.0
          %681 = vmatprep.subr.mxu0 0.0
          %682 = vmatpush1.msra.mxu0 0.0
          %683 = vmatprep.subr.mxu0 0.0
          %684 = vmatpush1.msra.mxu0 0.0
          %685 = vmatprep.subr.mxu0 0.0
          %686 = vmatpush1.msra.mxu0 0.0
          %687 = vmatprep.subr.mxu0 0.0
          %688 = vmatpush1.msra.mxu0 0.0
          %689 = vmatprep.subr.mxu0 0.0
          %690 = vmatpush1.msra.mxu0 0.0
          %691 = vmatprep.subr.mxu0 0.0
          %692 = vmatpush1.msra.mxu0 0.0
          %693 = vmatprep.subr.mxu0 0.0
          %694 = vmatpush1.msra.mxu0 0.0
          %695 = vmatprep.mubr.f32.mxu0 0.0
          %696 = vmatmul.mubr.f32.gmra.mrb[0].mxu0 %v607
          %v697 = vpop.f32.mrb[0].mxu0
          %v698 = vadd.f32 %v629, %v697
          %v699 = vpop.f32.mrb[0].mxu0
          %700 = vdwg.mxu0
          %vm701 = vcmp.ge.f32.partialorder %v698, 0.0
          %v702 = vmul.f32 %v698, 0.02
          %v703 = vsel %vm701, %v698, %v702
          %vm704 = vcmask 1045504
          %v705 = vsel %vm704, %v703, 0.0
          %706 = vadd.xlane.f32.xlu0 %v705
          %v707 = vpop.xlane.xlu0 %706
          %v708 = vrcp.pop 128.0
          %v709 = vmul.f32 %v707, %v708
          %v710 = vsub.f32 %v703, %v709
          %v711 = vmul.f32 %v710, %v710
          %v712 = vsel %vm704, %v711, 0.0
          %713 = vadd.xlane.f32.xlu0 %v712
          %v714 = vpop.xlane.xlu0 %713
          %v715 = vmul.f32 %v714, %v708
          %v716 = vadd.f32 %v715, 1e-05
          %v717 = vrsqrt.pop %v716
          %v718 = vmul.f32 %v710, %v717
          %v719 = vld [vmem:[%s4] sm:$0x1]
          %v721 = vlaneseq
          %v722 = vshrl.u32 %v721, 7
          %v723 = vsub.s32 0, %v722
          %v724 = vrot.slane %v719, %v723
          %v726 = vmul.f32 %v718, %v724
          %v727 = vld [vmem:[%s5] sm:$0x1]
          %v729 = vlaneseq
          %v730 = vshrl.u32 %v729, 7
          %v731 = vsub.s32 0, %v730
          %v732 = vrot.slane %v727, %v731
          %v734 = vadd.f32 %v726, %v732
          %735 = vst [vmem:[#allocation4] sm:$0x3f] %v734
        $region104: #{tpu_custom_call.1} parent=91 // pred_fallthru
          _
        // Predicated region
        $region105: #{tpu_custom_call.1} parent=91 // pred_check
          %p736 = pneg %p164
        $region106: #{tpu_custom_call.1} parent=91 // pred_check_branch
          %738 = sbr.rel (%p736) target = $region108
        $region107: #{tpu_custom_call.1} parent=91 // pred_region
          %s740 = ssub.s32 128, 128
          %741 = vsyncadd [#allocation5], %s740
          %s743 = sshll.u32 [#allocation4], 4
          %s744 = int_to_ptr.vmem [resolvable:$true] %s743
          %746 = dma.vmem_to_hbm [thread:$0]  %s744, 128, %s6, [#allocation5]
        $region108: #{tpu_custom_call.1} parent=91 // pred_fallthru
          _
        // Predicated region
        $region109: #{tpu_custom_call.1} parent=91 // pred_check
          %p747 = pneg %p164
        $region110: #{tpu_custom_call.1} parent=91 // pred_check_branch
          %749 = sbr.rel (%p747) target = $region112
        $region111: #{tpu_custom_call.1} parent=91 // pred_region
          %750 = dma.done [#allocation5], 128
        $region112: #{tpu_custom_call.1} parent=91 // pred_fallthru
          _
      $region92: #{tpu_custom_call.1} parent=5 // pred_fallthru
        _
      %p751 = scmp.le.s32.totalorder 2, %s13
      // Predicated region
      $region113: #{tpu_custom_call.1} parent=5 // pred_check
        %p752 = pneg %p751
      $region114: #{tpu_custom_call.1} parent=5 // pred_check_branch
        %754 = sbr.rel (%p752) target = $region116
      $region115: #{tpu_custom_call.1} parent=5 // pred_region
        %s755 = ssub.s32 %s13, 2
      $region116: #{tpu_custom_call.1} parent=5 // pred_fallthru
        _
    $region6: #{tpu_custom_call.1} parent=1 // loop_footer
      %s17 = sadd.s32 1, %s13
    $region7: #{tpu_custom_call.1} parent=1 // loop_footer_branch
      %12 = sbr.rel target = $region3
    $region8: #{tpu_custom_call.1} parent=1 // loop_exit
      _
    %756 = vsyncpa [#allocation5], 1
    %s757 = scalar_lea.sflag [#allocation5], 1
    %758 = vsyncpa %s757, 1

</llo_original>
